<compile_context>
chip_gen: v5e
topology: v5e:2x2
jax: 0.10.0
libtpu: 0.0.40
codegen_flags: <defaults>
</compile_context>

<pallas_src>
import functools

import jax
import jax.numpy as jnp
from jax import lax
from jax.experimental import pallas as pl
from jax.experimental.pallas import tpu as pltpu


def _round_up(x, m):
    return ((x + m - 1) // m) * m


def _pick_row_chunk(tm, tv, start, max_bytes=256 * 1024):
    """Largest row (sublane) chunk that divides tm and keeps f32 temps small."""
    rc = min(start, tm)
    while (rc * 2 <= tm and tm % (rc * 2) == 0
           and (rc * 2) * tv * 4 <= max_bytes):
        rc *= 2
    return rc


# ---------------------------------------------------------------------------
# Kernel
# ---------------------------------------------------------------------------
def _jsd_kernel(logq_ref, logp_ref, out_ref, *, beta, v_total, row_chunk,
                mask_tail):
    """grid = (row_tiles, vocab_tiles); vocab (last grid axis) is the reduction.

    out_ref is a lane-dense (tm, 128) f32 block, resident across the vocab axis
    (same block index for every j) and used directly as the accumulator; the
    final cross-lane sum over its 128 lanes happens in the JAX wrapper.
    """
    j = pl.program_id(1)
    tm, tv = logq_ref.shape
    rc = row_chunk
    n_row_chunks = tm // rc
    lane_groups = tv // 128

    @pl.when(j == 0)
    def _():
        out_ref[...] = jnp.zeros_like(out_ref)

    if mask_tail:
        # Lanes at/past the true (128-aligned) vocab width read OOB garbage
        # from the partial last vocab block; force them to 0 so their term is
        # exactly 0.  Hoisted out of the row loop (no CSE of broadcasts).
        lane_id = lax.broadcasted_iota(jnp.int32, (rc, tv), 1)
        thresh = v_total - j * tv

    @pl.loop(0, n_row_chunks)
    def _(c):
        r = pl.multiple_of(c * rc, rc)
        lq = logq_ref[pl.ds(r, rc), :].astype(jnp.float32)
        lp = logp_ref[pl.ds(r, rc), :].astype(jnp.float32)
        if mask_tail:
            valid = lane_id < thresh
            lq = jnp.where(valid, lq, 0.0)
            lp = jnp.where(valid, lp, 0.0)
        p = jnp.exp(lp)
        q = jnp.exp(lq)
        bp = beta * p
        bq = (1.0 - beta) * q
        m = bp + bq                      # lerp(q, p, beta)
        # NOTE: if both p and q underflow to 0, log(m) = -inf and the term is
        # 0 * -inf = NaN; the PyTorch module behaves identically, so we keep
        # it faithful rather than clamping m.
        log_m = jnp.log(m)
        term = bp * (lp - log_m) + bq * (lq - log_m)
        # Fold the tv lanes into 128 lane groups with pure VPU adds; the single
        # cross-lane reduce is done once in the wrapper.
        partial = term[:, 0:128]
        for g in range(1, lane_groups):
            partial = partial + term[:, g * 128:(g + 1) * 128]
        out_ref[pl.ds(r, rc), :] = out_ref[pl.ds(r, rc), :] + partial


# ---------------------------------------------------------------------------
# Wrappers
# ---------------------------------------------------------------------------
def jsd_row_loss(log_q, log_p, beta=0.5, vmem_budget_bytes=None):
    """Per-row generalized JSD loss. log_q, log_p: (N, V). Returns (N,) f32."""
    assert log_q.shape == log_p.shape
    N, V = log_q.shape
    dsize = jnp.dtype(log_q.dtype).itemsize
    # Sublane packing: 8 rows for 32-bit dtypes, 16 for 16-bit.
    row_mult = max(8, 32 // max(dsize, 1))

    # Pad ONLY the vocab axis, and only when it is not lane-aligned (rare for
    # real vocabularies).  Zero padding is exact: log_p == log_q == 0 gives
    # p == q == m == 1 and a zero per-element term.  Rows are never padded.
    if V % 128 != 0:
        pad = 128 - V % 128
        log_q = jnp.pad(log_q, ((0, 0), (0, pad)))
        log_p = jnp.pad(log_p, ((0, 0), (0, pad)))
    V128 = log_q.shape[1]

    # --- VMEM budgeting -----------------------------------------------------
    try:
        vmem_cap = int(pltpu.get_tpu_info().vmem_capacity_bytes)
    except Exception:
        vmem_cap = 64 * 1024 * 1024          # conservative (v7x per-TC size)
    if vmem_budget_bytes is None:
        # Budget covers the 2 inputs x 2 pipeline buffers; the resident output
        # block and chunked temporaries are accounted separately below.
        # v5e/v6e (128 MiB): 32 MiB; v7x (64 MiB): 16 MiB.
        vmem_budget_bytes = min(32 * 1024 * 1024,
                                max(8 * 1024 * 1024,
                                    vmem_cap // 2 - 16 * 1024 * 1024))

    n_rows = _round_up(max(N, 1), row_mult)

    # --- tile selection -------------------------------------------------
    # input footprint = 2 inputs * 2 buffers * tm * tv * dsize
    tm_full = (vmem_budget_bytes // (4 * V128 * dsize)) // row_mult * row_mult
    if tm_full >= row_mult:
        # A whole (128-aligned) vocab row fits: collapse the reduction axis.
        tv = V128
        tm_cap = 2048 if V128 <= 2048 else 512   # fat row tiles for tiny vocabs
        tm = max(row_mult, min(tm_cap, tm_full, n_rows) // row_mult * row_mult)
    else:
        tm = max(row_mult, min(256, n_rows) // row_mult * row_mult)
        tv_budget = vmem_budget_bytes // (4 * tm * dsize)
        if tv_budget >= 512:
            tv = tv_budget // 512 * 512          # >=512 lanes per streamed tile
        else:
            tv = max(128, tv_budget // 128 * 128)
        tv = min(tv, V128)

    rc = _pick_row_chunk(tm, tv, row_mult)
    mask_tail = (V128 % tv) != 0

    grid = (pl.cdiv(N, tm), pl.cdiv(V128, tv))

    # VMEM limit consistent with what this kernel actually touches.
    est = (4 * tm * tv * dsize               # double-buffered input tiles
           + 2 * tm * 128 * 4                # resident lane-dense output block
           + 8 * rc * tv * 4                 # bounded per-chunk f32 temporaries
           + 4 * 1024 * 1024)                # compiler-internal scratch headroom
    vmem_limit = int(min(vmem_cap, max(est, 16 * 1024 * 1024)))

    out = pl.pallas_call(
        functools.partial(_jsd_kernel, beta=float(beta), v_total=V128,
                          row_chunk=rc, mask_tail=mask_tail),
        out_shape=jax.ShapeDtypeStruct((N, 128), jnp.float32),
        grid_spec=pltpu.PrefetchScalarGridSpec(
            num_scalar_prefetch=0,
            grid=grid,
            in_specs=[
                pl.BlockSpec((tm, tv), lambda i, j: (i, j)),
                pl.BlockSpec((tm, tv), lambda i, j: (i, j)),
            ],
            out_specs=pl.BlockSpec((tm, 128), lambda i, j: (i, 0)),
        ),
        compiler_params=pltpu.CompilerParams(
            # Row axis independent -> "parallel" (splits across v7x's 2 TCs);
            # vocab axis is the reduction -> innermost + "arbitrary".
            dimension_semantics=("parallel", "arbitrary"),
            vmem_limit_bytes=vmem_limit,
        ),
    )(log_q, log_p)

    # Cheap lane-dense finish: cross-lane sum of the 128 partials per row.
    return jnp.sum(out, axis=-1)


def jsd(log_q, log_p, label=None, beta=0.5, ignore_index=-100,
        dtype=jnp.float32, vmem_budget_bytes=None):
    """Forward-pass equivalent of the PyTorch JSD module."""
    V = log_q.shape[-1]
    # Keep the native dtype; the kernel upcasts per-chunk in-register.
    log_q2 = log_q.reshape(-1, V)
    log_p2 = log_p.reshape(-1, V)

    loss = jsd_row_loss(log_q2, log_p2, beta=beta,
                        vmem_budget_bytes=vmem_budget_bytes)  # (N,) f32

    if label is not None:
        label = label.reshape(-1)
        keep = label != ignore_index
        loss = jnp.where(keep, loss, 0.0)
        n_non_ignore = keep.sum().astype(jnp.float32)
        total = jnp.where(n_non_ignore > 0, jnp.sum(loss) / n_non_ignore, 0.0)
    else:
        total = jnp.sum(loss / log_q2.shape[0])
    return total.astype(dtype)


def _jsd_ref(log_q, log_p, label=None, beta=0.5, ignore_index=-100):
    """Pure-JAX reference mirroring the PyTorch module."""
    V = log_q.shape[-1]
    log_p = log_p.reshape(-1, V).astype(jnp.float32)
    log_q = log_q.reshape(-1, V).astype(jnp.float32)
    m = (1.0 - beta) * jnp.exp(log_q) + beta * jnp.exp(log_p)
    log_m = jnp.log(m)
    kl_p = jnp.exp(log_p) * (log_p - log_m)
    kl_q = jnp.exp(log_q) * (log_q - log_m)
    loss = beta * kl_p.sum(-1) + (1.0 - beta) * kl_q.sum(-1)
    if label is not None:
        keep = label.reshape(-1) != ignore_index
        loss = jnp.where(keep, loss, 0.0)
        n = keep.sum().astype(jnp.float32)
        return jnp.where(n > 0, jnp.sum(loss) / n, 0.0)
    return jnp.sum(loss / log_q.shape[0])


if __name__ == "__main__":
    key = jax.random.PRNGKey(0)
    k1, k2, k3, k4, k5 = jax.random.split(key, 5)

    # Small shapes consistent with the module: (B, T, V) log-probs.
    B, T, V = 2, 8, 256   # N = 16 rows
    log_q = jax.nn.log_softmax(jax.random.normal(k1, (B, T, V), jnp.float32), -1)
    log_p = jax.nn.log_softmax(jax.random.normal(k2, (B, T, V), jnp.float32), -1)
    label = jax.random.randint(k3, (B * T,), 0, V).at[0].set(-100).at[5].set(-100)

    # 1) no-label path (vocab axis collapsed into a single block)
    out1 = jax.block_until_ready(jsd(log_q, log_p))
    ref1 = _jsd_ref(log_q, log_p)
    assert jnp.allclose(out1, ref1, rtol=1e-4, atol=1e-6), (out1, ref1)

    # 2) label / ignore_index path
    out2 = jax.block_until_ready(jsd(log_q, log_p, label=label))
    ref2 = _jsd_ref(log_q, log_p, label=label)
    assert jnp.allclose(out2, ref2, rtol=1e-4, atol=1e-6), (out2, ref2)

    # 3) tiny VMEM budget -> forces the multi-step vocab-reduction grid axis
    out3 = jax.block_until_ready(
        jsd(log_q, log_p, label=label, vmem_budget_bytes=4096))
    assert jnp.allclose(out3, ref2, rtol=1e-4, atol=1e-6), (out3, ref2)

    # 4) native bf16 inputs streamed without a wrapper-side upcast
    lq_bf, lp_bf = log_q.astype(jnp.bfloat16), log_p.astype(jnp.bfloat16)
    out4 = jax.block_until_ready(jsd(lq_bf, lp_bf))
    ref4 = _jsd_ref(lq_bf, lp_bf)
    assert jnp.allclose(out4, ref4, rtol=1e-3, atol=1e-5), (out4, ref4)

    # 5) vocab tile that does not divide V -> exercises the in-kernel lane mask
    B5, T5, V5 = 2, 4, 384   # N = 8; this budget forces tv = 256 < 384
    lq5 = jax.nn.log_softmax(jax.random.normal(k4, (B5, T5, V5), jnp.float32), -1)
    lp5 = jax.nn.log_softmax(jax.random.normal(k5, (B5, T5, V5), jnp.float32), -1)
    out5 = jax.block_until_ready(jsd(lq5, lp5, vmem_budget_bytes=40000))
    ref5 = _jsd_ref(lq5, lp5)
    assert jnp.allclose(out5, ref5, rtol=1e-4, atol=1e-6), (out5, ref5)

    # 6) vocab not 128-aligned -> exercises the (rare) lane-pad path
    V6 = 200
    lq6 = jax.nn.log_softmax(jax.random.normal(k4, (B, T, V6), jnp.float32), -1)
    lp6 = jax.nn.log_softmax(jax.random.normal(k5, (B, T, V6), jnp.float32), -1)
    out6 = jax.block_until_ready(jsd(lq6, lp6))
    ref6 = _jsd_ref(lq6, lp6)
    assert jnp.allclose(out6, ref6, rtol=1e-4, atol=1e-6), (out6, ref6)

    print("KERNEL_OK")
</pallas_src>

<mosaic_0001>
module attributes {stable_mosaic.version = 11 : i64} {
  func.func @_jsd_kernel(%arg0: i32, %arg1: i32, %arg2: memref<16x256xf32, #tpu.memory_space<vmem>>, %arg3: memref<16x256xf32, #tpu.memory_space<vmem>>, %arg4: memref<16x128xf32, #tpu.memory_space<vmem>>) attributes {dimension_semantics = [#tpu.dimension_semantics<parallel>, #tpu.dimension_semantics<arbitrary>], iteration_bounds = array<i64: 1, 1>, scalar_prefetch = 0 : i64, scratch_operands = 0 : i64, tpu.core_type = #tpu.core_type<tc>, window_params = [{transform_indices = @transform_0, window_bounds = array<i64: 16, 256>}, {transform_indices = @transform_1, window_bounds = array<i64: 16, 256>}, {transform_indices = @transform_2, window_bounds = array<i64: 16, 128>}]} {
    %c0_i32 = arith.constant 0 : i32
    %0 = arith.cmpi eq, %arg1, %c0_i32 : i32
    %1 = arith.extui %0 : i1 to i32
    %c0_i32_0 = arith.constant 0 : i32
    %2 = arith.cmpi ne, %1, %c0_i32_0 : i32
    scf.if %2 {
      %cst_8 = arith.constant 0.000000e+00 : f32
      %32 = vector.broadcast %cst_8 : f32 to vector<16x128xf32>
      %c0_9 = arith.constant 0 : index
      %c0_10 = arith.constant 0 : index
      %33 = vector.load %arg4[%c0_9, %c0_10] : memref<16x128xf32, #tpu.memory_space<vmem>>, vector<16x128xf32>
      tpu.vector_store %arg4[%c0_9, %c0_10], %32 {strides = array<i32>} : memref<16x128xf32, #tpu.memory_space<vmem>>, vector<16x128xf32>,
    } else {
    }
    %c0_i32_1 = arith.constant 0 : i32
    %c1_i32 = arith.constant 1 : i32
    %3 = arith.muli %c0_i32_1, %c1_i32 : i32
    %c0_i32_2 = arith.constant 0 : i32
    %4 = arith.addi %c0_i32_2, %3 : i32
    %c16_i32 = arith.constant 16 : i32
    %5 = arith.muli %4, %c16_i32 : i32
    %6 = tpu.assume_multiple %5, 16 : i32
    %7 = arith.index_cast %6 : i32 to index
    %c0 = arith.constant 0 : index
    %8 = vector.load %arg2[%7, %c0] : memref<16x256xf32, #tpu.memory_space<vmem>>, vector<16x256xf32>
    %9 = arith.index_cast %6 : i32 to index
    %c0_3 = arith.constant 0 : index
    %10 = vector.load %arg3[%9, %c0_3] : memref<16x256xf32, #tpu.memory_space<vmem>>, vector<16x256xf32>
    %11 = math.exp %10 : vector<16x256xf32>
    %12 = math.exp %8 : vector<16x256xf32>
    %cst = arith.constant 5.000000e-01 : f32
    %13 = vector.broadcast %cst : f32 to vector<16x256xf32>
    %14 = arith.mulf %13, %11 : vector<16x256xf32>
    %cst_4 = arith.constant 5.000000e-01 : f32
    %15 = vector.broadcast %cst_4 : f32 to vector<16x256xf32>
    %16 = arith.mulf %15, %12 : vector<16x256xf32>
    %17 = arith.addf %14, %16 : vector<16x256xf32>
    %18 = math.log %17 : vector<16x256xf32>
    %19 = arith.subf %10, %18 : vector<16x256xf32>
    %20 = arith.mulf %14, %19 : vector<16x256xf32>
    %21 = arith.subf %8, %18 : vector<16x256xf32>
    %22 = arith.mulf %16, %21 : vector<16x256xf32>
    %23 = arith.addf %20, %22 : vector<16x256xf32>
    %24 = vector.extract_strided_slice %23 {offsets = [0, 0], sizes = [16, 128], strides = [1, 1]} : vector<16x256xf32> to vector<16x128xf32>
    %25 = vector.extract_strided_slice %23 {offsets = [0, 128], sizes = [16, 128], strides = [1, 1]} : vector<16x256xf32> to vector<16x128xf32>
    %26 = arith.addf %24, %25 : vector<16x128xf32>
    %27 = arith.index_cast %6 : i32 to index
    %c0_5 = arith.constant 0 : index
    %28 = vector.load %arg4[%27, %c0_5] : memref<16x128xf32, #tpu.memory_space<vmem>>, vector<16x128xf32>
    %29 = arith.addf %28, %26 : vector<16x128xf32>
    %30 = arith.index_cast %6 : i32 to index
    %c0_6 = arith.constant 0 : index
    %31 = vector.load %arg4[%30, %c0_6] : memref<16x128xf32, #tpu.memory_space<vmem>>, vector<16x128xf32>
    tpu.vector_store %arg4[%30, %c0_6], %29 {strides = array<i32>} : memref<16x128xf32, #tpu.memory_space<vmem>>, vector<16x128xf32>,
    %c1_i32_7 = arith.constant 1 : i32
    return
  }
  func.func @transform_0(%arg0: i32, %arg1: i32) -> (i32, i32) {
    %c0_i32 = arith.constant 0 : i32
    return %arg0, %arg1 : i32, i32
  }
  func.func @transform_1(%arg0: i32, %arg1: i32) -> (i32, i32) {
    %c0_i32 = arith.constant 0 : i32
    return %arg0, %arg1 : i32, i32
  }
  func.func @transform_2(%arg0: i32, %arg1: i32) -> (i32, i32) {
    %c0_i32 = arith.constant 0 : i32
    %c0_i32_0 = arith.constant 0 : i32
    return %arg0, %c0_i32 : i32, i32
  }
}

</mosaic_0001>

<llo_original>
// kernel: tpu_custom_call.1
$region0: #{tpu_custom_call.1}
  #allocation0 [shape = 'u32[]', space=smem, size = 0x4, offset = 0x4, fixed_abs, tag = 'smem constant byte address 0x4 - core index']
  #allocation1 [shape = 'u32[72,128]{1,0:T(1,128)}', space=vmem, size = 0x9000, scoped, tag = 'internal scratch']
  %s0 = inlined_call_operand.hbm [shape: f32[16,256], index: 0, kind: input, shape index: {}]
  %s1 = inlined_call_operand.hbm [shape: f32[16,256], index: 1, kind: input, shape index: {}]
  %s2 = inlined_call_operand.hbm [shape: f32[16,128], index: 2, kind: output, shape index: {}]
  %s3 = sld [smem:[#allocation0]]
  $region30: #{tpu_custom_call.1} parent=0
    _
  %s5 = ssub.s32 1, %s3
  %s6 = scalar_select 0, %s5, %s3
  $region1: #{tpu_custom_call.1} parent=0
    #allocation2 [shape = 'u8[16384]{0}', space=vmem, size = 0x4000, scoped, tag = 'input window, operand 0, single buffered']
    #allocation3 [shape = 's32[1]{0}', space=sflag, size = 0x4, scoped, tag = 'scoped memory for tpu_custom_call.1']
    #allocation4 [shape = 's32[1]{0}', space=sflag, size = 0x4, scoped, tag = 'scoped memory for tpu_custom_call.1']
    #allocation5 [shape = 'u8[16384]{0}', space=vmem, size = 0x4000, scoped, tag = 'input window, operand 1, single buffered']
    #allocation6 [shape = 's32[1]{0}', space=sflag, size = 0x4, scoped, tag = 'scoped memory for tpu_custom_call.1']
    #allocation7 [shape = 'u8[8192]{0}', space=vmem, size = 0x2000, scoped, tag = 'output window, operand 0, single buffered']
    %7 = vsyncpa [#allocation3], 0
    %8 = vsyncpa [#allocation6], 0
    %9 = vsyncpa [#allocation4], 0
    // Predicated region
    $region2: #{tpu_custom_call.1} parent=1 // pred_check
      _
    $region3: #{tpu_custom_call.1} parent=1 // pred_check_branch
      %11 = sbr.rel (0) target = $region5
    $region4: #{tpu_custom_call.1} parent=1 // pred_region
      %13 = vsyncadd [#allocation3], 0
      %s14 = sshll.u32 %s0, 4
      %s15 = int_to_ptr.hbm [resolvable:$true] %s14
      %s16 = sshll.u32 [#allocation2], 4
      %s17 = int_to_ptr.vmem [resolvable:$true] %s16
      %22 = dma.hbm_to_vmem [thread:$0]  %s15, 512, %s17, [#allocation3], 256, 256, 16
    $region5: #{tpu_custom_call.1} parent=1 // pred_fallthru
      _
    // Predicated region
    $region6: #{tpu_custom_call.1} parent=1 // pred_check
      _
    $region7: #{tpu_custom_call.1} parent=1 // pred_check_branch
      %24 = sbr.rel (0) target = $region9
    $region8: #{tpu_custom_call.1} parent=1 // pred_region
      %26 = vsyncadd [#allocation6], 0
      %s27 = sshll.u32 %s1, 4
      %s28 = int_to_ptr.hbm [resolvable:$true] %s27
      %s29 = sshll.u32 [#allocation5], 4
      %s30 = int_to_ptr.vmem [resolvable:$true] %s29
      %35 = dma.hbm_to_vmem [thread:$0]  %s28, 512, %s30, [#allocation6], 256, 256, 16
    $region9: #{tpu_custom_call.1} parent=1 // pred_fallthru
      _
    // Predicated region
    $region10: #{tpu_custom_call.1} parent=1 // pred_check
      _
    $region11: #{tpu_custom_call.1} parent=1 // pred_check_branch
      %37 = sbr.rel (0) target = $region13
    $region12: #{tpu_custom_call.1} parent=1 // pred_region
      %39 = dma.done [#allocation3], 512
    $region13: #{tpu_custom_call.1} parent=1 // pred_fallthru
      _
    // Predicated region
    $region14: #{tpu_custom_call.1} parent=1 // pred_check
      _
    $region15: #{tpu_custom_call.1} parent=1 // pred_check_branch
      %41 = sbr.rel (0) target = $region17
    $region16: #{tpu_custom_call.1} parent=1 // pred_region
      %43 = dma.done [#allocation6], 512
    $region17: #{tpu_custom_call.1} parent=1 // pred_fallthru
      _
    %p44 = scmp.eq.s32.totalorder 0, 0
    // Predicated region
    $region18: #{tpu_custom_call.1} parent=1 // pred_check
      %p45 = pneg %p44
    $region19: #{tpu_custom_call.1} parent=1 // pred_check_branch
      %47 = sbr.rel (%p45) target = $region21
    $region20: #{tpu_custom_call.1} parent=1 // pred_region
      %48 = vst [vmem:[#allocation7] sm:$0xff] 0.0
      %49 = vst [vmem:[#allocation7 + $0x8] sm:$0xff] 0.0
    $region21: #{tpu_custom_call.1} parent=1 // pred_fallthru
      _
    %s50 = smul.u32 0, 2
    %s51 = smul.addr %s50, 8
    %s52 = scalar_lea.vmem [#allocation2], %s51
    %v53 = vld [vmem:[%s52] sm:$0xff]
    %v54 = vld [vmem:[%s52 + $0x8] sm:$0xff]
    %v55 = vld [vmem:[%s52 + $0x10] sm:$0xff]
    %v56 = vld [vmem:[%s52 + $0x18] sm:$0xff]
    %s57 = smul.addr %s50, 8
    %s58 = scalar_lea.vmem [#allocation5], %s57
    %v59 = vld [vmem:[%s58] sm:$0xff]
    %v60 = vld [vmem:[%s58 + $0x8] sm:$0xff]
    %v61 = vld [vmem:[%s58 + $0x10] sm:$0xff]
    %v62 = vld [vmem:[%s58 + $0x18] sm:$0xff]
    %v63 = vmul.f32 %v59, 1.442695
    %v64 = vpow.pop %v63
    %v65 = vmul.f32 %v60, 1.442695
    %v66 = vpow.pop %v65
    %v67 = vmul.f32 %v61, 1.442695
    %v68 = vpow.pop %v67
    %v69 = vmul.f32 %v62, 1.442695
    %v70 = vpow.pop %v69
    %v71 = vmul.f32 %v53, 1.442695
    %v72 = vpow.pop %v71
    %v73 = vmul.f32 %v54, 1.442695
    %v74 = vpow.pop %v73
    %v75 = vmul.f32 %v55, 1.442695
    %v76 = vpow.pop %v75
    %v77 = vmul.f32 %v56, 1.442695
    %v78 = vpow.pop %v77
    %v79 = vmul.f32 %v64, 0.5
    %v80 = vmul.f32 %v66, 0.5
    %v81 = vmul.f32 %v68, 0.5
    %v82 = vmul.f32 %v70, 0.5
    %v83 = vmul.f32 %v72, 0.5
    %v84 = vmul.f32 %v74, 0.5
    %v85 = vmul.f32 %v76, 0.5
    %v86 = vmul.f32 %v78, 0.5
    %v87 = vadd.f32 %v79, %v83
    %v88 = vadd.f32 %v80, %v84
    %v89 = vadd.f32 %v81, %v85
    %v90 = vadd.f32 %v82, %v86
    %v91 = vlog2.pop %v87
    %v92 = vmul.f32 %v91, 0.6931472
    %v93 = vlog2.pop %v88
    %v94 = vmul.f32 %v93, 0.6931472
    %v95 = vlog2.pop %v89
    %v96 = vmul.f32 %v95, 0.6931472
    %v97 = vlog2.pop %v90
    %v98 = vmul.f32 %v97, 0.6931472
    %v99 = vsub.f32 %v59, %v92
    %v100 = vsub.f32 %v60, %v94
    %v101 = vsub.f32 %v61, %v96
    %v102 = vsub.f32 %v62, %v98
    %v103 = vmul.f32 %v79, %v99
    %v104 = vmul.f32 %v80, %v100
    %v105 = vmul.f32 %v81, %v101
    %v106 = vmul.f32 %v82, %v102
    %v107 = vsub.f32 %v53, %v92
    %v108 = vsub.f32 %v54, %v94
    %v109 = vsub.f32 %v55, %v96
    %v110 = vsub.f32 %v56, %v98
    %v111 = vmul.f32 %v83, %v107
    %v112 = vmul.f32 %v84, %v108
    %v113 = vmul.f32 %v85, %v109
    %v114 = vmul.f32 %v86, %v110
    %v115 = vadd.f32 %v103, %v111
    %v116 = vadd.f32 %v104, %v112
    %v117 = vadd.f32 %v105, %v113
    %v118 = vadd.f32 %v106, %v114
    %v119 = vadd.f32 %v115, %v116
    %v120 = vadd.f32 %v117, %v118
    %v121 = vld [vmem:[#allocation7] sm:$0xff]
    %v122 = vld [vmem:[#allocation7 + $0x8] sm:$0xff]
    %v123 = vadd.f32 %v121, %v119
    %v124 = vadd.f32 %v122, %v120
    %125 = vst [vmem:[#allocation7] sm:$0xff] %v123
    %126 = vst [vmem:[#allocation7 + $0x8] sm:$0xff] %v124
    // Predicated region
    $region22: #{tpu_custom_call.1} parent=1 // pred_check
      _
    $region23: #{tpu_custom_call.1} parent=1 // pred_check_branch
      %128 = sbr.rel (0) target = $region25
    $region24: #{tpu_custom_call.1} parent=1 // pred_region
      %130 = vsyncadd [#allocation4], 0
      %s131 = sshll.u32 [#allocation7], 4
      %s132 = int_to_ptr.vmem [resolvable:$true] %s131
      %s133 = sshll.u32 %s2, 4
      %s134 = int_to_ptr.hbm [resolvable:$true] %s133
      %139 = dma.vmem_to_hbm [thread:$0]  %s132, 256, %s134, [#allocation4], 128, 128, 8
    $region25: #{tpu_custom_call.1} parent=1 // pred_fallthru
      _
    // Predicated region
    $region26: #{tpu_custom_call.1} parent=1 // pred_check
      _
    $region27: #{tpu_custom_call.1} parent=1 // pred_check_branch
      %141 = sbr.rel (0) target = $region29
    $region28: #{tpu_custom_call.1} parent=1 // pred_region
      %143 = dma.done [#allocation4], 256
    $region29: #{tpu_custom_call.1} parent=1 // pred_fallthru
      _
    %144 = vsyncpa [#allocation3], 1
    %145 = vsyncpa [#allocation6], 1
    %146 = vsyncpa [#allocation4], 1

</llo_original>
